<compile_context>
chip_gen: v7x
topology: tpu7x:2x2x1
jax: 0.10.0
libtpu: 0.0.40
codegen_flags: <defaults>
</compile_context>

<pallas_src>
import math

import jax
import jax.numpy as jnp
from jax import lax
from jax.experimental import pallas as pl
from jax.experimental.pallas import tpu as pltpu

FEAT = 4          # Linear(4, 4) / LayerNorm(4)
PACK = 2          # rows packed per lane column (PACK * FEAT = 8 f32 sublanes)
CHUNK = 512       # inner strip-mine width in lanes (multiple of 128)


def _round_up(n, m):
    return ((n + m - 1) // m) * m


def _bert_ln_gelu_kernel(wc_ref, bc_ref, g_ref, beta_ref, x_ref, o_ref):
    # x_ref / o_ref: (8, TILE).  Sublane 2*f + p holds feature f of the p-th
    # row of each packed row-pair; lanes index row-pairs (fully dense).
    # wc_ref: (4, 4) centered weights, torch (out, in) layout, in SMEM.
    # bc_ref / g_ref / beta_ref: (4,) centered bias / gamma / beta, in SMEM.
    tile = x_ref.shape[1]
    n_chunks = tile // CHUNK

    inv_feat = jnp.float32(1.0 / FEAT)
    eps = jnp.float32(1e-5)
    inv_sqrt2 = jnp.float32(1.0 / math.sqrt(2.0))

    # Strip-mine the tile into CHUNK-wide lane slabs (fully unrolled; every
    # slice is static) so per-chunk temporaries stay resident in vregs.
    for ci in range(n_chunks):
        lo = ci * CHUNK
        lanes = slice(lo, lo + CHUNK)
        xf = [x_ref[2 * f:2 * f + 2, lanes] for f in range(FEAT)]   # (2, CHUNK)

        # Centered linear: c[o] = sum_i W'[o, i] * x[i] + b'[o]
        # (the per-row mean is already removed because W'/b' are centered
        #  over the output axis in the wrapper).
        c = []
        for o in range(FEAT):
            acc = xf[0] * wc_ref[o, 0]
            for i in range(1, FEAT):
                acc = acc + xf[i] * wc_ref[o, i]
            c.append(acc + bc_ref[o])

        # LayerNorm over features (biased variance, eps=1e-5); gamma folded
        # into the rsqrt scale.
        var = (c[0] * c[0] + c[1] * c[1] + c[2] * c[2] + c[3] * c[3]) * inv_feat
        rstd = lax.rsqrt(var + eps)

        # Exact GELU: 0.5 * z * (1 + erf(z / sqrt(2)))  (torch.nn.GELU default).
        # Direct per-sublane-pair stores; no concatenate temporary.
        for o in range(FEAT):
            z = c[o] * (rstd * g_ref[o]) + beta_ref[o]
            o_ref[2 * o:2 * o + 2, lanes] = 0.5 * z * (1.0 + lax.erf(z * inv_sqrt2))


def bert_ln_gelu(x, weight, bias, ln_weight, ln_bias, *, tile_pairs=8192):
    """x: (..., 4) float. weight: (4, 4) torch layout (out, in); rest: (4,)."""
    orig_shape = x.shape
    assert orig_shape[-1] == FEAT, f"module is Linear(4,4)/LayerNorm(4); got {orig_shape[-1]}"

    x2d = x.reshape(-1, FEAT).astype(jnp.float32)
    rows = x2d.shape[0]
    pairs = -(-rows // PACK)                                 # ceil(rows / 2)

    # Tile size (in row-pairs / lanes): large to amortize per-step overhead,
    # but keep >= 2 grid steps when there is enough work so the "parallel"
    # rows axis can shard across v7x's two TensorCores.
    tile = min(tile_pairs, _round_up(pairs, CHUNK))
    if pairs >= 2 * CHUNK:
        tile = min(tile, _round_up((pairs + 1) // 2, CHUNK))
    pairs_p = _round_up(pairs, tile)
    rows_p = PACK * pairs_p

    if rows_p != rows:
        x2d = jnp.pad(x2d, ((0, rows_p - rows), (0, 0)))     # padded rows discarded

    # Packed lane-dense layout: (8, pairs_p), sublane 2*f + p = feature f of
    # pair-member p (layout plumbing, done once outside the kernel).
    x_packed = (x2d.reshape(pairs_p, PACK, FEAT)
                    .transpose(2, 1, 0)
                    .reshape(PACK * FEAT, pairs_p))

    w = weight.astype(jnp.float32)                           # (out, in)
    b = bias.astype(jnp.float32)
    g = ln_weight.astype(jnp.float32)
    beta = ln_bias.astype(jnp.float32)
    # Fold LayerNorm's mean removal into the linear parameters:
    #   mean_o(x W^T + b) = x mean_o(W)^T + mean(b)
    wc = w - jnp.mean(w, axis=0, keepdims=True)
    bc = b - jnp.mean(b)

    smem = pl.BlockSpec(memory_space=pltpu.MemorySpace.SMEM)
    cost = pl.CostEstimate(
        flops=rows_p * FEAT * (2 * FEAT + 12),               # FMAs + LN + GELU poly
        transcendentals=rows_p * (FEAT + 1),                 # erf per elem + rsqrt per row
        bytes_accessed=2 * rows_p * FEAT * 4,                # read x + write out (f32)
    )

    out_packed = pl.pallas_call(
        _bert_ln_gelu_kernel,
        out_shape=jax.ShapeDtypeStruct((PACK * FEAT, pairs_p), jnp.float32),
        grid=(pairs_p // tile,),
        in_specs=[
            smem,                                            # centered weight (4, 4)
            smem,                                            # centered bias (4,)
            smem,                                            # gamma (4,)
            smem,                                            # beta (4,)
            pl.BlockSpec((PACK * FEAT, tile), lambda i: (0, i)),   # packed x
        ],
        out_specs=pl.BlockSpec((PACK * FEAT, tile), lambda i: (0, i)),
        compiler_params=pltpu.CompilerParams(
            dimension_semantics=("parallel",),
        ),
        cost_estimate=cost,
    )(wc, bc, g, beta, x_packed)

    # Unpack: sublane 2*f + p, lane c  ->  row 2*c + p, feature f.
    out2d = (out_packed.reshape(FEAT, PACK, pairs_p)
                        .transpose(2, 1, 0)
                        .reshape(rows_p, FEAT))
    return out2d[:rows].reshape(orig_shape)


def _reference(x, weight, bias, ln_weight, ln_bias):
    y = jnp.einsum("...i,oi->...o", x, weight) + bias
    mean = jnp.mean(y, axis=-1, keepdims=True)
    var = jnp.mean((y - mean) ** 2, axis=-1, keepdims=True)
    yn = (y - mean) / jnp.sqrt(var + 1e-5) * ln_weight + ln_bias
    return jax.nn.gelu(yn, approximate=False)


if __name__ == "__main__":
    key = jax.random.PRNGKey(0)
    kx, kw, kb, kg, kbeta = jax.random.split(key, 5)

    hidden = FEAT
    # Deterministic synthetic parameters (shapes from torch.nn.Linear(4,4) /
    # torch.nn.LayerNorm(4)); not a checkpoint load.
    weight = jax.random.normal(kw, (hidden, hidden), dtype=jnp.float32) * 0.5   # (out, in)
    bias = jax.random.normal(kb, (hidden,), dtype=jnp.float32) * 0.1
    ln_weight = 1.0 + 0.1 * jax.random.normal(kg, (hidden,), dtype=jnp.float32)
    ln_bias = 0.1 * jax.random.normal(kbeta, (hidden,), dtype=jnp.float32)

    # Small shape (single padded tile) and a larger one (grid of 2 ->
    # exercises the pipelined / megacore-parallel rows axis).
    for shape in [(2, 8, hidden), (2, 4096, hidden)]:
        x = jax.random.normal(kx, shape, dtype=jnp.float32)
        out = jax.block_until_ready(
            bert_ln_gelu(x, weight, bias, ln_weight, ln_bias))
        ref = _reference(x, weight, bias, ln_weight, ln_bias)
        assert out.shape == shape
        err = float(jnp.max(jnp.abs(out - ref)))
        assert err < 1e-4, f"max abs err {err} at shape {shape}"

    print("KERNEL_OK")
</pallas_src>

<mosaic_0001>
module attributes {stable_mosaic.version = 11 : i64} {
  func.func @_bert_ln_gelu_kernel(%arg0: i32, %arg1: memref<4x4xf32, #tpu.memory_space<smem>>, %arg2: memref<4xf32, #tpu.memory_space<smem>>, %arg3: memref<4xf32, #tpu.memory_space<smem>>, %arg4: memref<4xf32, #tpu.memory_space<smem>>, %arg5: memref<8x512xf32, #tpu.memory_space<vmem>>, %arg6: memref<8x512xf32, #tpu.memory_space<vmem>>) attributes {dimension_semantics = [#tpu.dimension_semantics<parallel>], iteration_bounds = array<i64: 1>, scalar_prefetch = 0 : i64, scratch_operands = 0 : i64, tpu.core_type = #tpu.core_type<tc>, window_params = [{transform_indices = @transform_0, window_bounds = array<i64: 4, 4>}, {transform_indices = @transform_1, window_bounds = array<i64: 4>}, {transform_indices = @transform_2, window_bounds = array<i64: 4>}, {transform_indices = @transform_3, window_bounds = array<i64: 4>}, {transform_indices = @transform_4, window_bounds = array<i64: 8, 512>}, {transform_indices = @transform_5, window_bounds = array<i64: 8, 512>}]} {
    %c0 = arith.constant 0 : index
    %c0_0 = arith.constant 0 : index
    %0 = vector.load %arg5[%c0, %c0_0] : memref<8x512xf32, #tpu.memory_space<vmem>>, vector<2x512xf32>
    %c2 = arith.constant 2 : index
    %c0_1 = arith.constant 0 : index
    %1 = vector.load %arg5[%c2, %c0_1] : memref<8x512xf32, #tpu.memory_space<vmem>>, vector<2x512xf32>
    %c4 = arith.constant 4 : index
    %c0_2 = arith.constant 0 : index
    %2 = vector.load %arg5[%c4, %c0_2] : memref<8x512xf32, #tpu.memory_space<vmem>>, vector<2x512xf32>
    %c6 = arith.constant 6 : index
    %c0_3 = arith.constant 0 : index
    %3 = vector.load %arg5[%c6, %c0_3] : memref<8x512xf32, #tpu.memory_space<vmem>>, vector<2x512xf32>
    %c0_4 = arith.constant 0 : index
    %c0_5 = arith.constant 0 : index
    %4 = memref.load %arg1[%c0_4, %c0_5] : memref<4x4xf32, #tpu.memory_space<smem>>
    %5 = vector.broadcast %4 : f32 to vector<2x512xf32>
    %6 = arith.mulf %0, %5 : vector<2x512xf32>
    %c0_6 = arith.constant 0 : index
    %c1 = arith.constant 1 : index
    %7 = memref.load %arg1[%c0_6, %c1] : memref<4x4xf32, #tpu.memory_space<smem>>
    %8 = vector.broadcast %7 : f32 to vector<2x512xf32>
    %9 = arith.mulf %1, %8 : vector<2x512xf32>
    %10 = arith.addf %6, %9 : vector<2x512xf32>
    %c0_7 = arith.constant 0 : index
    %c2_8 = arith.constant 2 : index
    %11 = memref.load %arg1[%c0_7, %c2_8] : memref<4x4xf32, #tpu.memory_space<smem>>
    %12 = vector.broadcast %11 : f32 to vector<2x512xf32>
    %13 = arith.mulf %2, %12 : vector<2x512xf32>
    %14 = arith.addf %10, %13 : vector<2x512xf32>
    %c0_9 = arith.constant 0 : index
    %c3 = arith.constant 3 : index
    %15 = memref.load %arg1[%c0_9, %c3] : memref<4x4xf32, #tpu.memory_space<smem>>
    %16 = vector.broadcast %15 : f32 to vector<2x512xf32>
    %17 = arith.mulf %3, %16 : vector<2x512xf32>
    %18 = arith.addf %14, %17 : vector<2x512xf32>
    %c0_10 = arith.constant 0 : index
    %19 = memref.load %arg2[%c0_10] : memref<4xf32, #tpu.memory_space<smem>>
    %20 = vector.broadcast %19 : f32 to vector<2x512xf32>
    %21 = arith.addf %18, %20 : vector<2x512xf32>
    %c1_11 = arith.constant 1 : index
    %c0_12 = arith.constant 0 : index
    %22 = memref.load %arg1[%c1_11, %c0_12] : memref<4x4xf32, #tpu.memory_space<smem>>
    %23 = vector.broadcast %22 : f32 to vector<2x512xf32>
    %24 = arith.mulf %0, %23 : vector<2x512xf32>
    %c1_13 = arith.constant 1 : index
    %c1_14 = arith.constant 1 : index
    %25 = memref.load %arg1[%c1_13, %c1_14] : memref<4x4xf32, #tpu.memory_space<smem>>
    %26 = vector.broadcast %25 : f32 to vector<2x512xf32>
    %27 = arith.mulf %1, %26 : vector<2x512xf32>
    %28 = arith.addf %24, %27 : vector<2x512xf32>
    %c1_15 = arith.constant 1 : index
    %c2_16 = arith.constant 2 : index
    %29 = memref.load %arg1[%c1_15, %c2_16] : memref<4x4xf32, #tpu.memory_space<smem>>
    %30 = vector.broadcast %29 : f32 to vector<2x512xf32>
    %31 = arith.mulf %2, %30 : vector<2x512xf32>
    %32 = arith.addf %28, %31 : vector<2x512xf32>
    %c1_17 = arith.constant 1 : index
    %c3_18 = arith.constant 3 : index
    %33 = memref.load %arg1[%c1_17, %c3_18] : memref<4x4xf32, #tpu.memory_space<smem>>
    %34 = vector.broadcast %33 : f32 to vector<2x512xf32>
    %35 = arith.mulf %3, %34 : vector<2x512xf32>
    %36 = arith.addf %32, %35 : vector<2x512xf32>
    %c1_19 = arith.constant 1 : index
    %37 = memref.load %arg2[%c1_19] : memref<4xf32, #tpu.memory_space<smem>>
    %38 = vector.broadcast %37 : f32 to vector<2x512xf32>
    %39 = arith.addf %36, %38 : vector<2x512xf32>
    %c2_20 = arith.constant 2 : index
    %c0_21 = arith.constant 0 : index
    %40 = memref.load %arg1[%c2_20, %c0_21] : memref<4x4xf32, #tpu.memory_space<smem>>
    %41 = vector.broadcast %40 : f32 to vector<2x512xf32>
    %42 = arith.mulf %0, %41 : vector<2x512xf32>
    %c2_22 = arith.constant 2 : index
    %c1_23 = arith.constant 1 : index
    %43 = memref.load %arg1[%c2_22, %c1_23] : memref<4x4xf32, #tpu.memory_space<smem>>
    %44 = vector.broadcast %43 : f32 to vector<2x512xf32>
    %45 = arith.mulf %1, %44 : vector<2x512xf32>
    %46 = arith.addf %42, %45 : vector<2x512xf32>
    %c2_24 = arith.constant 2 : index
    %c2_25 = arith.constant 2 : index
    %47 = memref.load %arg1[%c2_24, %c2_25] : memref<4x4xf32, #tpu.memory_space<smem>>
    %48 = vector.broadcast %47 : f32 to vector<2x512xf32>
    %49 = arith.mulf %2, %48 : vector<2x512xf32>
    %50 = arith.addf %46, %49 : vector<2x512xf32>
    %c2_26 = arith.constant 2 : index
    %c3_27 = arith.constant 3 : index
    %51 = memref.load %arg1[%c2_26, %c3_27] : memref<4x4xf32, #tpu.memory_space<smem>>
    %52 = vector.broadcast %51 : f32 to vector<2x512xf32>
    %53 = arith.mulf %3, %52 : vector<2x512xf32>
    %54 = arith.addf %50, %53 : vector<2x512xf32>
    %c2_28 = arith.constant 2 : index
    %55 = memref.load %arg2[%c2_28] : memref<4xf32, #tpu.memory_space<smem>>
    %56 = vector.broadcast %55 : f32 to vector<2x512xf32>
    %57 = arith.addf %54, %56 : vector<2x512xf32>
    %c3_29 = arith.constant 3 : index
    %c0_30 = arith.constant 0 : index
    %58 = memref.load %arg1[%c3_29, %c0_30] : memref<4x4xf32, #tpu.memory_space<smem>>
    %59 = vector.broadcast %58 : f32 to vector<2x512xf32>
    %60 = arith.mulf %0, %59 : vector<2x512xf32>
    %c3_31 = arith.constant 3 : index
    %c1_32 = arith.constant 1 : index
    %61 = memref.load %arg1[%c3_31, %c1_32] : memref<4x4xf32, #tpu.memory_space<smem>>
    %62 = vector.broadcast %61 : f32 to vector<2x512xf32>
    %63 = arith.mulf %1, %62 : vector<2x512xf32>
    %64 = arith.addf %60, %63 : vector<2x512xf32>
    %c3_33 = arith.constant 3 : index
    %c2_34 = arith.constant 2 : index
    %65 = memref.load %arg1[%c3_33, %c2_34] : memref<4x4xf32, #tpu.memory_space<smem>>
    %66 = vector.broadcast %65 : f32 to vector<2x512xf32>
    %67 = arith.mulf %2, %66 : vector<2x512xf32>
    %68 = arith.addf %64, %67 : vector<2x512xf32>
    %c3_35 = arith.constant 3 : index
    %c3_36 = arith.constant 3 : index
    %69 = memref.load %arg1[%c3_35, %c3_36] : memref<4x4xf32, #tpu.memory_space<smem>>
    %70 = vector.broadcast %69 : f32 to vector<2x512xf32>
    %71 = arith.mulf %3, %70 : vector<2x512xf32>
    %72 = arith.addf %68, %71 : vector<2x512xf32>
    %c3_37 = arith.constant 3 : index
    %73 = memref.load %arg2[%c3_37] : memref<4xf32, #tpu.memory_space<smem>>
    %74 = vector.broadcast %73 : f32 to vector<2x512xf32>
    %75 = arith.addf %72, %74 : vector<2x512xf32>
    %76 = arith.mulf %21, %21 : vector<2x512xf32>
    %77 = arith.mulf %39, %39 : vector<2x512xf32>
    %78 = arith.addf %76, %77 : vector<2x512xf32>
    %79 = arith.mulf %57, %57 : vector<2x512xf32>
    %80 = arith.addf %78, %79 : vector<2x512xf32>
    %81 = arith.mulf %75, %75 : vector<2x512xf32>
    %82 = arith.addf %80, %81 : vector<2x512xf32>
    %cst = arith.constant 2.500000e-01 : f32
    %83 = vector.broadcast %cst : f32 to vector<2x512xf32>
    %84 = arith.mulf %82, %83 : vector<2x512xf32>
    %cst_38 = arith.constant 9.99999974E-6 : f32
    %85 = vector.broadcast %cst_38 : f32 to vector<2x512xf32>
    %86 = arith.addf %84, %85 : vector<2x512xf32>
    %87 = math.rsqrt %86 : vector<2x512xf32>
    %c0_39 = arith.constant 0 : index
    %88 = memref.load %arg3[%c0_39] : memref<4xf32, #tpu.memory_space<smem>>
    %89 = vector.broadcast %88 : f32 to vector<2x512xf32>
    %90 = arith.mulf %87, %89 : vector<2x512xf32>
    %91 = arith.mulf %21, %90 : vector<2x512xf32>
    %c0_40 = arith.constant 0 : index
    %92 = memref.load %arg4[%c0_40] : memref<4xf32, #tpu.memory_space<smem>>
    %93 = vector.broadcast %92 : f32 to vector<2x512xf32>
    %94 = arith.addf %91, %93 : vector<2x512xf32>
    %cst_41 = arith.constant 5.000000e-01 : f32
    %95 = vector.broadcast %cst_41 : f32 to vector<2x512xf32>
    %96 = arith.mulf %95, %94 : vector<2x512xf32>
    %cst_42 = arith.constant 0.707106769 : f32
    %97 = vector.broadcast %cst_42 : f32 to vector<2x512xf32>
    %98 = arith.mulf %94, %97 : vector<2x512xf32>
    %99 = math.erf %98 : vector<2x512xf32>
    %cst_43 = arith.constant 1.000000e+00 : f32
    %100 = vector.broadcast %cst_43 : f32 to vector<2x512xf32>
    %101 = arith.addf %100, %99 : vector<2x512xf32>
    %102 = arith.mulf %96, %101 : vector<2x512xf32>
    %c0_44 = arith.constant 0 : index
    %c0_45 = arith.constant 0 : index
    %103 = vector.load %arg6[%c0_44, %c0_45] : memref<8x512xf32, #tpu.memory_space<vmem>>, vector<2x512xf32>
    tpu.vector_store %arg6[%c0_44, %c0_45], %102 {strides = array<i32>} : memref<8x512xf32, #tpu.memory_space<vmem>>, vector<2x512xf32>,
    %c1_46 = arith.constant 1 : index
    %104 = memref.load %arg3[%c1_46] : memref<4xf32, #tpu.memory_space<smem>>
    %105 = vector.broadcast %104 : f32 to vector<2x512xf32>
    %106 = arith.mulf %87, %105 : vector<2x512xf32>
    %107 = arith.mulf %39, %106 : vector<2x512xf32>
    %c1_47 = arith.constant 1 : index
    %108 = memref.load %arg4[%c1_47] : memref<4xf32, #tpu.memory_space<smem>>
    %109 = vector.broadcast %108 : f32 to vector<2x512xf32>
    %110 = arith.addf %107, %109 : vector<2x512xf32>
    %cst_48 = arith.constant 5.000000e-01 : f32
    %111 = vector.broadcast %cst_48 : f32 to vector<2x512xf32>
    %112 = arith.mulf %111, %110 : vector<2x512xf32>
    %cst_49 = arith.constant 0.707106769 : f32
    %113 = vector.broadcast %cst_49 : f32 to vector<2x512xf32>
    %114 = arith.mulf %110, %113 : vector<2x512xf32>
    %115 = math.erf %114 : vector<2x512xf32>
    %cst_50 = arith.constant 1.000000e+00 : f32
    %116 = vector.broadcast %cst_50 : f32 to vector<2x512xf32>
    %117 = arith.addf %116, %115 : vector<2x512xf32>
    %118 = arith.mulf %112, %117 : vector<2x512xf32>
    %c2_51 = arith.constant 2 : index
    %c0_52 = arith.constant 0 : index
    %119 = vector.load %arg6[%c2_51, %c0_52] : memref<8x512xf32, #tpu.memory_space<vmem>>, vector<2x512xf32>
    tpu.vector_store %arg6[%c2_51, %c0_52], %118 {strides = array<i32>} : memref<8x512xf32, #tpu.memory_space<vmem>>, vector<2x512xf32>,
    %c2_53 = arith.constant 2 : index
    %120 = memref.load %arg3[%c2_53] : memref<4xf32, #tpu.memory_space<smem>>
    %121 = vector.broadcast %120 : f32 to vector<2x512xf32>
    %122 = arith.mulf %87, %121 : vector<2x512xf32>
    %123 = arith.mulf %57, %122 : vector<2x512xf32>
    %c2_54 = arith.constant 2 : index
    %124 = memref.load %arg4[%c2_54] : memref<4xf32, #tpu.memory_space<smem>>
    %125 = vector.broadcast %124 : f32 to vector<2x512xf32>
    %126 = arith.addf %123, %125 : vector<2x512xf32>
    %cst_55 = arith.constant 5.000000e-01 : f32
    %127 = vector.broadcast %cst_55 : f32 to vector<2x512xf32>
    %128 = arith.mulf %127, %126 : vector<2x512xf32>
    %cst_56 = arith.constant 0.707106769 : f32
    %129 = vector.broadcast %cst_56 : f32 to vector<2x512xf32>
    %130 = arith.mulf %126, %129 : vector<2x512xf32>
    %131 = math.erf %130 : vector<2x512xf32>
    %cst_57 = arith.constant 1.000000e+00 : f32
    %132 = vector.broadcast %cst_57 : f32 to vector<2x512xf32>
    %133 = arith.addf %132, %131 : vector<2x512xf32>
    %134 = arith.mulf %128, %133 : vector<2x512xf32>
    %c4_58 = arith.constant 4 : index
    %c0_59 = arith.constant 0 : index
    %135 = vector.load %arg6[%c4_58, %c0_59] : memref<8x512xf32, #tpu.memory_space<vmem>>, vector<2x512xf32>
    tpu.vector_store %arg6[%c4_58, %c0_59], %134 {strides = array<i32>} : memref<8x512xf32, #tpu.memory_space<vmem>>, vector<2x512xf32>,
    %c3_60 = arith.constant 3 : index
    %136 = memref.load %arg3[%c3_60] : memref<4xf32, #tpu.memory_space<smem>>
    %137 = vector.broadcast %136 : f32 to vector<2x512xf32>
    %138 = arith.mulf %87, %137 : vector<2x512xf32>
    %139 = arith.mulf %75, %138 : vector<2x512xf32>
    %c3_61 = arith.constant 3 : index
    %140 = memref.load %arg4[%c3_61] : memref<4xf32, #tpu.memory_space<smem>>
    %141 = vector.broadcast %140 : f32 to vector<2x512xf32>
    %142 = arith.addf %139, %141 : vector<2x512xf32>
    %cst_62 = arith.constant 5.000000e-01 : f32
    %143 = vector.broadcast %cst_62 : f32 to vector<2x512xf32>
    %144 = arith.mulf %143, %142 : vector<2x512xf32>
    %cst_63 = arith.constant 0.707106769 : f32
    %145 = vector.broadcast %cst_63 : f32 to vector<2x512xf32>
    %146 = arith.mulf %142, %145 : vector<2x512xf32>
    %147 = math.erf %146 : vector<2x512xf32>
    %cst_64 = arith.constant 1.000000e+00 : f32
    %148 = vector.broadcast %cst_64 : f32 to vector<2x512xf32>
    %149 = arith.addf %148, %147 : vector<2x512xf32>
    %150 = arith.mulf %144, %149 : vector<2x512xf32>
    %c6_65 = arith.constant 6 : index
    %c0_66 = arith.constant 0 : index
    %151 = vector.load %arg6[%c6_65, %c0_66] : memref<8x512xf32, #tpu.memory_space<vmem>>, vector<2x512xf32>
    tpu.vector_store %arg6[%c6_65, %c0_66], %150 {strides = array<i32>} : memref<8x512xf32, #tpu.memory_space<vmem>>, vector<2x512xf32>,
    return
  }
  func.func @transform_0(%arg0: i32) -> (i32, i32) {
    %c0_i32 = arith.constant 0 : i32
    %c0_i32_0 = arith.constant 0 : i32
    %c0_i32_1 = arith.constant 0 : i32
    return %c0_i32, %c0_i32_0 : i32, i32
  }
  func.func @transform_1(%arg0: i32) -> i32 {
    %c0_i32 = arith.constant 0 : i32
    %c0_i32_0 = arith.constant 0 : i32
    return %c0_i32 : i32
  }
  func.func @transform_2(%arg0: i32) -> i32 {
    %c0_i32 = arith.constant 0 : i32
    %c0_i32_0 = arith.constant 0 : i32
    return %c0_i32 : i32
  }
  func.func @transform_3(%arg0: i32) -> i32 {
    %c0_i32 = arith.constant 0 : i32
    %c0_i32_0 = arith.constant 0 : i32
    return %c0_i32 : i32
  }
  func.func @transform_4(%arg0: i32) -> (i32, i32) {
    %c0_i32 = arith.constant 0 : i32
    %c0_i32_0 = arith.constant 0 : i32
    return %c0_i32, %arg0 : i32, i32
  }
  func.func @transform_5(%arg0: i32) -> (i32, i32) {
    %c0_i32 = arith.constant 0 : i32
    %c0_i32_0 = arith.constant 0 : i32
    return %c0_i32, %arg0 : i32, i32
  }
}

</mosaic_0001>

<llo_original>
// kernel: tpu_custom_call.1
$region0: #{tpu_custom_call.1}
  #allocation0 [shape = 'u32[]', space=smem, size = 0x4, offset = 0x4, fixed_abs, tag = 'smem constant byte address 0x4 - core index']
  #allocation1 [shape = 'u32[144,128]{1,0:T(1,128)}', space=vmem, size = 0x12000, scoped, tag = 'internal scratch']
  %s0 = inlined_call_operand.hbm [shape: f32[4,4], index: 0, kind: input, shape index: {}]
  %s1 = inlined_call_operand.vmem [shape: f32[4], index: 1, kind: input, shape index: {}]
  %s2 = inlined_call_operand.vmem [shape: f32[4], index: 2, kind: input, shape index: {}]
  %s3 = inlined_call_operand.vmem [shape: f32[4], index: 3, kind: input, shape index: {}]
  %s4 = inlined_call_operand.hbm [shape: f32[8,512], index: 4, kind: input, shape index: {}]
  %s5 = inlined_call_operand.hbm [shape: f32[8,512], index: 5, kind: output, shape index: {}]
  %s6 = sld [smem:[#allocation0]]
  $region50: #{tpu_custom_call.1} parent=0
    _
  %s8 = ssub.s32 1, %s6
  %s9 = scalar_select 0, %s8, %s6
  $region1: #{tpu_custom_call.1} parent=0
    #allocation2 [shape = 'u8[2048]{0}', space=smem, size = 0x800, scoped, tag = 'input window, operand 0, single buffered']
    #allocation3 [shape = 's32[1]{0}', space=sflag, size = 0x4, scoped, tag = 'scoped memory for tpu_custom_call.1']
    #allocation4 [shape = 's32[1]{0}', space=sflag, size = 0x4, scoped, tag = 'scoped memory for tpu_custom_call.1']
    #allocation5 [shape = 's32[1]{0}', space=sflag, size = 0x4, scoped, tag = 'scoped memory for tpu_custom_call.1']
    #allocation6 [shape = 's32[1]{0}', space=sflag, size = 0x4, scoped, tag = 'scoped memory for tpu_custom_call.1']
    #allocation7 [shape = 'u8[512]{0}', space=smem, size = 0x200, scoped, tag = 'input window, operand 1, single buffered']
    #allocation8 [shape = 'u8[512]{0}', space=smem, size = 0x200, scoped, tag = 'input window, operand 2, single buffered']
    #allocation9 [shape = 's32[1]{0}', space=sflag, size = 0x4, scoped, tag = 'scoped memory for tpu_custom_call.1']
    #allocation10 [shape = 'u8[512]{0}', space=smem, size = 0x200, scoped, tag = 'input window, operand 3, single buffered']
    #allocation11 [shape = 'u8[16384]{0}', space=vmem, size = 0x4000, scoped, tag = 'input window, operand 4, single buffered']
    #allocation12 [shape = 'u8[16384]{0}', space=vmem, size = 0x4000, scoped, tag = 'output window, operand 0, single buffered']
    %10 = vsyncpa [#allocation5], 0
    %11 = vsyncpa [#allocation6], 0
    %12 = vsyncpa [#allocation9], 0
    %13 = vsyncpa [#allocation3], 0
    %14 = vsyncpa [#allocation4], 0
    // Predicated region
    $region2: #{tpu_custom_call.1} parent=1 // pred_check
      _
    $region3: #{tpu_custom_call.1} parent=1 // pred_check_branch
      %16 = sbr.rel (0) target = $region5
    $region4: #{tpu_custom_call.1} parent=1 // pred_region
      %s18 = ssub.s32 64, 64
      %19 = vsyncadd [#allocation5], %s18
      %22 = dma.hbm_to_smem %s0, 64, [#allocation2], [#allocation5]
    $region5: #{tpu_custom_call.1} parent=1 // pred_fallthru
      _
    // Predicated region
    $region6: #{tpu_custom_call.1} parent=1 // pred_check
      _
    $region7: #{tpu_custom_call.1} parent=1 // pred_check_branch
      %24 = sbr.rel (0) target = $region9
    $region8: #{tpu_custom_call.1} parent=1 // pred_region
      %s26 = ssub.s32 16, 16
      %27 = vsyncadd [#allocation6], %s26
      %s29 = sshll.u32 %s1, 4
      %s30 = int_to_ptr.vmem [resolvable:$true] %s29
      %32 = dma.vmem_to_smem %s30, 16, [#allocation7], [#allocation6]
    $region9: #{tpu_custom_call.1} parent=1 // pred_fallthru
      _
    // Predicated region
    $region10: #{tpu_custom_call.1} parent=1 // pred_check
      _
    $region11: #{tpu_custom_call.1} parent=1 // pred_check_branch
      %34 = sbr.rel (0) target = $region13
    $region12: #{tpu_custom_call.1} parent=1 // pred_region
      %s36 = ssub.s32 16, 16
      %37 = vsyncadd [#allocation9], %s36
      %s39 = sshll.u32 %s2, 4
      %s40 = int_to_ptr.vmem [resolvable:$true] %s39
      %42 = dma.vmem_to_smem %s40, 16, [#allocation8], [#allocation9]
    $region13: #{tpu_custom_call.1} parent=1 // pred_fallthru
      _
    // Predicated region
    $region14: #{tpu_custom_call.1} parent=1 // pred_check
      _
    $region15: #{tpu_custom_call.1} parent=1 // pred_check_branch
      %44 = sbr.rel (0) target = $region17
    $region16: #{tpu_custom_call.1} parent=1 // pred_region
      %s46 = ssub.s32 16, 16
      %47 = vsyncadd [#allocation9], %s46
      %s49 = sshll.u32 %s3, 4
      %s50 = int_to_ptr.vmem [resolvable:$true] %s49
      %52 = dma.vmem_to_smem %s50, 16, [#allocation10], [#allocation9]
    $region17: #{tpu_custom_call.1} parent=1 // pred_fallthru
      _
    // Predicated region
    $region18: #{tpu_custom_call.1} parent=1 // pred_check
      _
    $region19: #{tpu_custom_call.1} parent=1 // pred_check_branch
      %54 = sbr.rel (0) target = $region21
    $region20: #{tpu_custom_call.1} parent=1 // pred_region
      %s56 = ssub.s32 512, 512
      %57 = vsyncadd [#allocation3], %s56
      %s59 = sshll.u32 [#allocation11], 4
      %s60 = int_to_ptr.vmem [resolvable:$true] %s59
      %62 = dma.hbm_to_vmem [thread:$0]  %s4, 512, %s60, [#allocation3]
    $region21: #{tpu_custom_call.1} parent=1 // pred_fallthru
      _
    // Predicated region
    $region22: #{tpu_custom_call.1} parent=1 // pred_check
      _
    $region23: #{tpu_custom_call.1} parent=1 // pred_check_branch
      %64 = sbr.rel (0) target = $region25
    $region24: #{tpu_custom_call.1} parent=1 // pred_region
      %65 = dma.done [#allocation5], 64
    $region25: #{tpu_custom_call.1} parent=1 // pred_fallthru
      _
    // Predicated region
    $region26: #{tpu_custom_call.1} parent=1 // pred_check
      _
    $region27: #{tpu_custom_call.1} parent=1 // pred_check_branch
      %67 = sbr.rel (0) target = $region29
    $region28: #{tpu_custom_call.1} parent=1 // pred_region
      %68 = dma.done [#allocation6], 16
    $region29: #{tpu_custom_call.1} parent=1 // pred_fallthru
      _
    // Predicated region
    $region30: #{tpu_custom_call.1} parent=1 // pred_check
      _
    $region31: #{tpu_custom_call.1} parent=1 // pred_check_branch
      %70 = sbr.rel (0) target = $region33
    $region32: #{tpu_custom_call.1} parent=1 // pred_region
      %71 = dma.done [#allocation9], 16
    $region33: #{tpu_custom_call.1} parent=1 // pred_fallthru
      _
    // Predicated region
    $region34: #{tpu_custom_call.1} parent=1 // pred_check
      _
    $region35: #{tpu_custom_call.1} parent=1 // pred_check_branch
      %73 = sbr.rel (0) target = $region37
    $region36: #{tpu_custom_call.1} parent=1 // pred_region
      %74 = dma.done [#allocation9], 16
    $region37: #{tpu_custom_call.1} parent=1 // pred_fallthru
      _
    // Predicated region
    $region38: #{tpu_custom_call.1} parent=1 // pred_check
      _
    $region39: #{tpu_custom_call.1} parent=1 // pred_check_branch
      %76 = sbr.rel (0) target = $region41
    $region40: #{tpu_custom_call.1} parent=1 // pred_region
      %77 = dma.done [#allocation3], 512
    $region41: #{tpu_custom_call.1} parent=1 // pred_fallthru
      _
    %78 = sfence
    %v79 = vld [vmem:[#allocation11] sm:$0x3]
    %v80 = vld [vmem:[#allocation11 + $0x8] sm:$0x3]
    %v81 = vld [vmem:[#allocation11 + $0x10] sm:$0x3]
    %v82 = vld [vmem:[#allocation11 + $0x18] sm:$0x3]
    %v83 = vld [vmem:[#allocation11] sm:$0xc]
    %v84 = vld [vmem:[#allocation11 + $0x8] sm:$0xc]
    %v85 = vld [vmem:[#allocation11 + $0x10] sm:$0xc]
    %v86 = vld [vmem:[#allocation11 + $0x18] sm:$0xc]
    %v87 = vld [vmem:[#allocation11] sm:$0x30]
    %v88 = vld [vmem:[#allocation11 + $0x8] sm:$0x30]
    %v89 = vld [vmem:[#allocation11 + $0x10] sm:$0x30]
    %v90 = vld [vmem:[#allocation11 + $0x18] sm:$0x30]
    %v91 = vld [vmem:[#allocation11] sm:$0xc0]
    %v92 = vld [vmem:[#allocation11 + $0x8] sm:$0xc0]
    %v93 = vld [vmem:[#allocation11 + $0x10] sm:$0xc0]
    %v94 = vld [vmem:[#allocation11 + $0x18] sm:$0xc0]
    %s95 = sld [smem:[#allocation2]]
    %v96 = vstv %s95
    %v97 = vmul.f32 %v79, %v96
    %v98 = vmul.f32 %v80, %v96
    %v99 = vmul.f32 %v81, %v96
    %v100 = vmul.f32 %v82, %v96
    %s101 = sld [smem:[#allocation2 + $0x1]]
    %v102 = vstv %s101
    %v103 = vmul.f32 %v83, %v102
    %v104 = vmul.f32 %v84, %v102
    %v105 = vmul.f32 %v85, %v102
    %v106 = vmul.f32 %v86, %v102
    %v111 = vrot.slane %v103, 2
    %v112 = vrot.slane %v104, 2
    %v113 = vrot.slane %v105, 2
    %v114 = vrot.slane %v106, 2
    %v119 = vadd.f32 %v97, %v111
    %v120 = vadd.f32 %v98, %v112
    %v121 = vadd.f32 %v99, %v113
    %v122 = vadd.f32 %v100, %v114
    %s123 = sld [smem:[#allocation2 + $0x2]]
    %v124 = vstv %s123
    %v125 = vmul.f32 %v87, %v124
    %v126 = vmul.f32 %v88, %v124
    %v127 = vmul.f32 %v89, %v124
    %v128 = vmul.f32 %v90, %v124
    %v133 = vrot.slane %v125, 4
    %v134 = vrot.slane %v126, 4
    %v135 = vrot.slane %v127, 4
    %v136 = vrot.slane %v128, 4
    %v141 = vadd.f32 %v119, %v133
    %v142 = vadd.f32 %v120, %v134
    %v143 = vadd.f32 %v121, %v135
    %v144 = vadd.f32 %v122, %v136
    %s145 = sld [smem:[#allocation2 + $0x3]]
    %v146 = vstv %s145
    %v147 = vmul.f32 %v91, %v146
    %v148 = vmul.f32 %v92, %v146
    %v149 = vmul.f32 %v93, %v146
    %v150 = vmul.f32 %v94, %v146
    %v155 = vrot.slane %v147, 6
    %v156 = vrot.slane %v148, 6
    %v157 = vrot.slane %v149, 6
    %v158 = vrot.slane %v150, 6
    %v163 = vadd.f32 %v141, %v155
    %v164 = vadd.f32 %v142, %v156
    %v165 = vadd.f32 %v143, %v157
    %v166 = vadd.f32 %v144, %v158
    %s167 = sld [smem:[#allocation7]]
    %v168 = vstv %s167
    %v169 = vadd.f32 %v163, %v168
    %v170 = vadd.f32 %v164, %v168
    %v171 = vadd.f32 %v165, %v168
    %v172 = vadd.f32 %v166, %v168
    %s173 = sld [smem:[#allocation2 + $0x80]]
    %v174 = vstv %s173
    %v175 = vmul.f32 %v79, %v174
    %v176 = vmul.f32 %v80, %v174
    %v177 = vmul.f32 %v81, %v174
    %v178 = vmul.f32 %v82, %v174
    %s179 = sld [smem:[#allocation2 + $0x81]]
    %v180 = vstv %s179
    %v181 = vmul.f32 %v83, %v180
    %v182 = vmul.f32 %v84, %v180
    %v183 = vmul.f32 %v85, %v180
    %v184 = vmul.f32 %v86, %v180
    %v189 = vrot.slane %v181, 2
    %v190 = vrot.slane %v182, 2
    %v191 = vrot.slane %v183, 2
    %v192 = vrot.slane %v184, 2
    %v197 = vadd.f32 %v175, %v189
    %v198 = vadd.f32 %v176, %v190
    %v199 = vadd.f32 %v177, %v191
    %v200 = vadd.f32 %v178, %v192
    %s201 = sld [smem:[#allocation2 + $0x82]]
    %v202 = vstv %s201
    %v203 = vmul.f32 %v87, %v202
    %v204 = vmul.f32 %v88, %v202
    %v205 = vmul.f32 %v89, %v202
    %v206 = vmul.f32 %v90, %v202
    %v211 = vrot.slane %v203, 4
    %v212 = vrot.slane %v204, 4
    %v213 = vrot.slane %v205, 4
    %v214 = vrot.slane %v206, 4
    %v219 = vadd.f32 %v197, %v211
    %v220 = vadd.f32 %v198, %v212
    %v221 = vadd.f32 %v199, %v213
    %v222 = vadd.f32 %v200, %v214
    %s223 = sld [smem:[#allocation2 + $0x83]]
    %v224 = vstv %s223
    %v225 = vmul.f32 %v91, %v224
    %v226 = vmul.f32 %v92, %v224
    %v227 = vmul.f32 %v93, %v224
    %v228 = vmul.f32 %v94, %v224
    %v233 = vrot.slane %v225, 6
    %v234 = vrot.slane %v226, 6
    %v235 = vrot.slane %v227, 6
    %v236 = vrot.slane %v228, 6
    %v241 = vadd.f32 %v219, %v233
    %v242 = vadd.f32 %v220, %v234
    %v243 = vadd.f32 %v221, %v235
    %v244 = vadd.f32 %v222, %v236
    %s245 = sld [smem:[#allocation7 + $0x1]]
    %v246 = vstv %s245
    %v247 = vadd.f32 %v241, %v246
    %v248 = vadd.f32 %v242, %v246
    %v249 = vadd.f32 %v243, %v246
    %v250 = vadd.f32 %v244, %v246
    %s251 = sld [smem:[#allocation2 + $0x100]]
    %v252 = vstv %s251
    %v253 = vmul.f32 %v79, %v252
    %v254 = vmul.f32 %v80, %v252
    %v255 = vmul.f32 %v81, %v252
    %v256 = vmul.f32 %v82, %v252
    %s257 = sld [smem:[#allocation2 + $0x101]]
    %v258 = vstv %s257
    %v259 = vmul.f32 %v83, %v258
    %v260 = vmul.f32 %v84, %v258
    %v261 = vmul.f32 %v85, %v258
    %v262 = vmul.f32 %v86, %v258
    %v267 = vrot.slane %v259, 2
    %v268 = vrot.slane %v260, 2
    %v269 = vrot.slane %v261, 2
    %v270 = vrot.slane %v262, 2
    %v275 = vadd.f32 %v253, %v267
    %v276 = vadd.f32 %v254, %v268
    %v277 = vadd.f32 %v255, %v269
    %v278 = vadd.f32 %v256, %v270
    %s279 = sld [smem:[#allocation2 + $0x102]]
    %v280 = vstv %s279
    %v281 = vmul.f32 %v87, %v280
    %v282 = vmul.f32 %v88, %v280
    %v283 = vmul.f32 %v89, %v280
    %v284 = vmul.f32 %v90, %v280
    %v289 = vrot.slane %v281, 4
    %v290 = vrot.slane %v282, 4
    %v291 = vrot.slane %v283, 4
    %v292 = vrot.slane %v284, 4
    %v297 = vadd.f32 %v275, %v289
    %v298 = vadd.f32 %v276, %v290
    %v299 = vadd.f32 %v277, %v291
    %v300 = vadd.f32 %v278, %v292
    %s301 = sld [smem:[#allocation2 + $0x103]]
    %v302 = vstv %s301
    %v303 = vmul.f32 %v91, %v302
    %v304 = vmul.f32 %v92, %v302
    %v305 = vmul.f32 %v93, %v302
    %v306 = vmul.f32 %v94, %v302
    %v311 = vrot.slane %v303, 6
    %v312 = vrot.slane %v304, 6
    %v313 = vrot.slane %v305, 6
    %v314 = vrot.slane %v306, 6
    %v319 = vadd.f32 %v297, %v311
    %v320 = vadd.f32 %v298, %v312
    %v321 = vadd.f32 %v299, %v313
    %v322 = vadd.f32 %v300, %v314
    %s323 = sld [smem:[#allocation7 + $0x2]]
    %v324 = vstv %s323
    %v325 = vadd.f32 %v319, %v324
    %v326 = vadd.f32 %v320, %v324
    %v327 = vadd.f32 %v321, %v324
    %v328 = vadd.f32 %v322, %v324
    %s329 = sld [smem:[#allocation2 + $0x180]]
    %v330 = vstv %s329
    %v331 = vmul.f32 %v79, %v330
    %v332 = vmul.f32 %v80, %v330
    %v333 = vmul.f32 %v81, %v330
    %v334 = vmul.f32 %v82, %v330
    %s335 = sld [smem:[#allocation2 + $0x181]]
    %v336 = vstv %s335
    %v337 = vmul.f32 %v83, %v336
    %v338 = vmul.f32 %v84, %v336
    %v339 = vmul.f32 %v85, %v336
    %v340 = vmul.f32 %v86, %v336
    %v345 = vrot.slane %v337, 2
    %v346 = vrot.slane %v338, 2
    %v347 = vrot.slane %v339, 2
    %v348 = vrot.slane %v340, 2
    %v353 = vadd.f32 %v331, %v345
    %v354 = vadd.f32 %v332, %v346
    %v355 = vadd.f32 %v333, %v347
    %v356 = vadd.f32 %v334, %v348
    %s357 = sld [smem:[#allocation2 + $0x182]]
    %v358 = vstv %s357
    %v359 = vmul.f32 %v87, %v358
    %v360 = vmul.f32 %v88, %v358
    %v361 = vmul.f32 %v89, %v358
    %v362 = vmul.f32 %v90, %v358
    %v367 = vrot.slane %v359, 4
    %v368 = vrot.slane %v360, 4
    %v369 = vrot.slane %v361, 4
    %v370 = vrot.slane %v362, 4
    %v375 = vadd.f32 %v353, %v367
    %v376 = vadd.f32 %v354, %v368
    %v377 = vadd.f32 %v355, %v369
    %v378 = vadd.f32 %v356, %v370
    %s379 = sld [smem:[#allocation2 + $0x183]]
    %v380 = vstv %s379
    %v381 = vmul.f32 %v91, %v380
    %v382 = vmul.f32 %v92, %v380
    %v383 = vmul.f32 %v93, %v380
    %v384 = vmul.f32 %v94, %v380
    %v389 = vrot.slane %v381, 6
    %v390 = vrot.slane %v382, 6
    %v391 = vrot.slane %v383, 6
    %v392 = vrot.slane %v384, 6
    %v397 = vadd.f32 %v375, %v389
    %v398 = vadd.f32 %v376, %v390
    %v399 = vadd.f32 %v377, %v391
    %v400 = vadd.f32 %v378, %v392
    %s401 = sld [smem:[#allocation7 + $0x3]]
    %v402 = vstv %s401
    %v403 = vadd.f32 %v397, %v402
    %v404 = vadd.f32 %v398, %v402
    %v405 = vadd.f32 %v399, %v402
    %v406 = vadd.f32 %v400, %v402
    %v407 = vmul.f32 %v169, %v169
    %v408 = vmul.f32 %v170, %v170
    %v409 = vmul.f32 %v171, %v171
    %v410 = vmul.f32 %v172, %v172
    %v411 = vmul.f32 %v247, %v247
    %v412 = vmul.f32 %v248, %v248
    %v413 = vmul.f32 %v249, %v249
    %v414 = vmul.f32 %v250, %v250
    %v415 = vadd.f32 %v407, %v411
    %v416 = vadd.f32 %v408, %v412
    %v417 = vadd.f32 %v409, %v413
    %v418 = vadd.f32 %v410, %v414
    %v419 = vmul.f32 %v325, %v325
    %v420 = vmul.f32 %v326, %v326
    %v421 = vmul.f32 %v327, %v327
    %v422 = vmul.f32 %v328, %v328
    %v423 = vadd.f32 %v415, %v419
    %v424 = vadd.f32 %v416, %v420
    %v425 = vadd.f32 %v417, %v421
    %v426 = vadd.f32 %v418, %v422
    %v427 = vmul.f32 %v403, %v403
    %v428 = vmul.f32 %v404, %v404
    %v429 = vmul.f32 %v405, %v405
    %v430 = vmul.f32 %v406, %v406
    %v431 = vadd.f32 %v423, %v427
    %v432 = vadd.f32 %v424, %v428
    %v433 = vadd.f32 %v425, %v429
    %v434 = vadd.f32 %v426, %v430
    %v435 = vmul.f32 %v431, 0.25
    %v436 = vmul.f32 %v432, 0.25
    %v437 = vmul.f32 %v433, 0.25
    %v438 = vmul.f32 %v434, 0.25
    %v439 = vadd.f32 %v435, 1e-05
    %v440 = vadd.f32 %v436, 1e-05
    %v441 = vadd.f32 %v437, 1e-05
    %v442 = vadd.f32 %v438, 1e-05
    %v443 = vrsqrt.pop %v439
    %v444 = vrsqrt.pop %v440
    %v445 = vrsqrt.pop %v441
    %v446 = vrsqrt.pop %v442
    %s447 = sld [smem:[#allocation8]]
    %v448 = vstv %s447
    %v449 = vmul.f32 %v443, %v448
    %v450 = vmul.f32 %v444, %v448
    %v451 = vmul.f32 %v445, %v448
    %v452 = vmul.f32 %v446, %v448
    %v453 = vmul.f32 %v169, %v449
    %v454 = vmul.f32 %v170, %v450
    %v455 = vmul.f32 %v171, %v451
    %v456 = vmul.f32 %v172, %v452
    %s457 = sld [smem:[#allocation10]]
    %v458 = vstv %s457
    %v459 = vadd.f32 %v453, %v458
    %v460 = vadd.f32 %v454, %v458
    %v461 = vadd.f32 %v455, %v458
    %v462 = vadd.f32 %v456, %v458
    %v463 = vmul.f32 %v459, 0.5
    %v464 = vmul.f32 %v460, 0.5
    %v465 = vmul.f32 %v461, 0.5
    %v466 = vmul.f32 %v462, 0.5
    %v467 = vmul.f32 %v459, 0.70710677
    %v468 = vmul.f32 %v460, 0.70710677
    %v469 = vmul.f32 %v461, 0.70710677
    %v470 = vmul.f32 %v462, 0.70710677
    %v471 = verf.f32.pop %v467
    %v472 = verf.f32.pop %v468
    %v473 = verf.f32.pop %v469
    %v474 = verf.f32.pop %v470
    %v475 = vadd.f32 %v471, 1.0
    %v476 = vadd.f32 %v472, 1.0
    %v477 = vadd.f32 %v473, 1.0
    %v478 = vadd.f32 %v474, 1.0
    %v479 = vmul.f32 %v463, %v475
    %v480 = vmul.f32 %v464, %v476
    %v481 = vmul.f32 %v465, %v477
    %v482 = vmul.f32 %v466, %v478
    %483 = vst [vmem:[#allocation12] sm:$0x3] %v479
    %484 = vst [vmem:[#allocation12 + $0x8] sm:$0x3] %v480
    %485 = vst [vmem:[#allocation12 + $0x10] sm:$0x3] %v481
    %486 = vst [vmem:[#allocation12 + $0x18] sm:$0x3] %v482
    %s487 = sld [smem:[#allocation8 + $0x1]]
    %v488 = vstv %s487
    %v489 = vmul.f32 %v443, %v488
    %v490 = vmul.f32 %v444, %v488
    %v491 = vmul.f32 %v445, %v488
    %v492 = vmul.f32 %v446, %v488
    %v493 = vmul.f32 %v247, %v489
    %v494 = vmul.f32 %v248, %v490
    %v495 = vmul.f32 %v249, %v491
    %v496 = vmul.f32 %v250, %v492
    %s497 = sld [smem:[#allocation10 + $0x1]]
    %v498 = vstv %s497
    %v499 = vadd.f32 %v493, %v498
    %v500 = vadd.f32 %v494, %v498
    %v501 = vadd.f32 %v495, %v498
    %v502 = vadd.f32 %v496, %v498
    %v503 = vmul.f32 %v499, 0.5
    %v504 = vmul.f32 %v500, 0.5
    %v505 = vmul.f32 %v501, 0.5
    %v506 = vmul.f32 %v502, 0.5
    %v507 = vmul.f32 %v499, 0.70710677
    %v508 = vmul.f32 %v500, 0.70710677
    %v509 = vmul.f32 %v501, 0.70710677
    %v510 = vmul.f32 %v502, 0.70710677
    %v511 = verf.f32.pop %v507
    %v512 = verf.f32.pop %v508
    %v513 = verf.f32.pop %v509
    %v514 = verf.f32.pop %v510
    %v515 = vadd.f32 %v511, 1.0
    %v516 = vadd.f32 %v512, 1.0
    %v517 = vadd.f32 %v513, 1.0
    %v518 = vadd.f32 %v514, 1.0
    %v519 = vmul.f32 %v503, %v515
    %v520 = vmul.f32 %v504, %v516
    %v521 = vmul.f32 %v505, %v517
    %v522 = vmul.f32 %v506, %v518
    %v527 = vrot.slane %v519, 6
    %v528 = vrot.slane %v520, 6
    %v529 = vrot.slane %v521, 6
    %v530 = vrot.slane %v522, 6
    %535 = vst [vmem:[#allocation12] sm:$0xc] %v527
    %536 = vst [vmem:[#allocation12 + $0x8] sm:$0xc] %v528
    %537 = vst [vmem:[#allocation12 + $0x10] sm:$0xc] %v529
    %538 = vst [vmem:[#allocation12 + $0x18] sm:$0xc] %v530
    %s539 = sld [smem:[#allocation8 + $0x2]]
    %v540 = vstv %s539
    %v541 = vmul.f32 %v443, %v540
    %v542 = vmul.f32 %v444, %v540
    %v543 = vmul.f32 %v445, %v540
    %v544 = vmul.f32 %v446, %v540
    %v545 = vmul.f32 %v325, %v541
    %v546 = vmul.f32 %v326, %v542
    %v547 = vmul.f32 %v327, %v543
    %v548 = vmul.f32 %v328, %v544
    %s549 = sld [smem:[#allocation10 + $0x2]]
    %v550 = vstv %s549
    %v551 = vadd.f32 %v545, %v550
    %v552 = vadd.f32 %v546, %v550
    %v553 = vadd.f32 %v547, %v550
    %v554 = vadd.f32 %v548, %v550
    %v555 = vmul.f32 %v551, 0.5
    %v556 = vmul.f32 %v552, 0.5
    %v557 = vmul.f32 %v553, 0.5
    %v558 = vmul.f32 %v554, 0.5
    %v559 = vmul.f32 %v551, 0.70710677
    %v560 = vmul.f32 %v552, 0.70710677
    %v561 = vmul.f32 %v553, 0.70710677
    %v562 = vmul.f32 %v554, 0.70710677
    %v563 = verf.f32.pop %v559
    %v564 = verf.f32.pop %v560
    %v565 = verf.f32.pop %v561
    %v566 = verf.f32.pop %v562
    %v567 = vadd.f32 %v563, 1.0
    %v568 = vadd.f32 %v564, 1.0
    %v569 = vadd.f32 %v565, 1.0
    %v570 = vadd.f32 %v566, 1.0
    %v571 = vmul.f32 %v555, %v567
    %v572 = vmul.f32 %v556, %v568
    %v573 = vmul.f32 %v557, %v569
    %v574 = vmul.f32 %v558, %v570
    %v579 = vrot.slane %v571, 4
    %v580 = vrot.slane %v572, 4
    %v581 = vrot.slane %v573, 4
    %v582 = vrot.slane %v574, 4
    %587 = vst [vmem:[#allocation12] sm:$0x30] %v579
    %588 = vst [vmem:[#allocation12 + $0x8] sm:$0x30] %v580
    %589 = vst [vmem:[#allocation12 + $0x10] sm:$0x30] %v581
    %590 = vst [vmem:[#allocation12 + $0x18] sm:$0x30] %v582
    %s591 = sld [smem:[#allocation8 + $0x3]]
    %v592 = vstv %s591
    %v593 = vmul.f32 %v443, %v592
    %v594 = vmul.f32 %v444, %v592
    %v595 = vmul.f32 %v445, %v592
    %v596 = vmul.f32 %v446, %v592
    %v597 = vmul.f32 %v403, %v593
    %v598 = vmul.f32 %v404, %v594
    %v599 = vmul.f32 %v405, %v595
    %v600 = vmul.f32 %v406, %v596
    %s601 = sld [smem:[#allocation10 + $0x3]]
    %v602 = vstv %s601
    %v603 = vadd.f32 %v597, %v602
    %v604 = vadd.f32 %v598, %v602
    %v605 = vadd.f32 %v599, %v602
    %v606 = vadd.f32 %v600, %v602
    %v607 = vmul.f32 %v603, 0.5
    %v608 = vmul.f32 %v604, 0.5
    %v609 = vmul.f32 %v605, 0.5
    %v610 = vmul.f32 %v606, 0.5
    %v611 = vmul.f32 %v603, 0.70710677
    %v612 = vmul.f32 %v604, 0.70710677
    %v613 = vmul.f32 %v605, 0.70710677
    %v614 = vmul.f32 %v606, 0.70710677
    %v615 = verf.f32.pop %v611
    %v616 = verf.f32.pop %v612
    %v617 = verf.f32.pop %v613
    %v618 = verf.f32.pop %v614
    %v619 = vadd.f32 %v615, 1.0
    %v620 = vadd.f32 %v616, 1.0
    %v621 = vadd.f32 %v617, 1.0
    %v622 = vadd.f32 %v618, 1.0
    %v623 = vmul.f32 %v607, %v619
    %v624 = vmul.f32 %v608, %v620
    %v625 = vmul.f32 %v609, %v621
    %v626 = vmul.f32 %v610, %v622
    %v631 = vrot.slane %v623, 2
    %v632 = vrot.slane %v624, 2
    %v633 = vrot.slane %v625, 2
    %v634 = vrot.slane %v626, 2
    %639 = vst [vmem:[#allocation12] sm:$0xc0] %v631
    %640 = vst [vmem:[#allocation12 + $0x8] sm:$0xc0] %v632
    %641 = vst [vmem:[#allocation12 + $0x10] sm:$0xc0] %v633
    %642 = vst [vmem:[#allocation12 + $0x18] sm:$0xc0] %v634
    // Predicated region
    $region42: #{tpu_custom_call.1} parent=1 // pred_check
      _
    $region43: #{tpu_custom_call.1} parent=1 // pred_check_branch
      %644 = sbr.rel (0) target = $region45
    $region44: #{tpu_custom_call.1} parent=1 // pred_region
      %s646 = ssub.s32 512, 512
      %647 = vsyncadd [#allocation4], %s646
      %s649 = sshll.u32 [#allocation12], 4
      %s650 = int_to_ptr.vmem [resolvable:$true] %s649
      %652 = dma.vmem_to_hbm [thread:$0]  %s650, 512, %s5, [#allocation4]
    $region45: #{tpu_custom_call.1} parent=1 // pred_fallthru
      _
    // Predicated region
    $region46: #{tpu_custom_call.1} parent=1 // pred_check
      _
    $region47: #{tpu_custom_call.1} parent=1 // pred_check_branch
      %654 = sbr.rel (0) target = $region49
    $region48: #{tpu_custom_call.1} parent=1 // pred_region
      %655 = dma.done [#allocation4], 512
    $region49: #{tpu_custom_call.1} parent=1 // pred_fallthru
      _
    %656 = vsyncpa [#allocation3], 1
    %657 = vsyncpa [#allocation4], 1
    %658 = vsyncpa [#allocation5], 1
    %659 = vsyncpa [#allocation6], 1
    %660 = vsyncpa [#allocation9], 1

</llo_original>
